<compile_context>
chip_gen: v6e
topology: v6e:2x2x1
jax: 0.10.0
libtpu: 0.0.40
codegen_flags: <defaults>
</compile_context>

<pallas_src>
import functools

import jax
import jax.numpy as jnp
from jax.experimental import pallas as pl
from jax.experimental.pallas import tpu as pltpu

LANE = 128     # TPU lane width
SUBLANE = 8    # TPU sublane width


def _round_up(n, m):
    return ((n + m - 1) // m) * m


def _cdiv(a, b):
    return (a + b - 1) // b


def _default_elementwise_dtype():
    """bf16 elementwise on v6e/v7x (native bf16 VPU); f32 on older gens (v5e etc.)."""
    try:
        kind = jax.devices()[0].device_kind.lower()
    except Exception:
        return jnp.float32
    for old in ("v2", "v3", "v4", "v5"):
        if old in kind:
            return jnp.float32
    return jnp.bfloat16


def _dqn_kernel(x_ref,
                w1_ref, b1_ref,
                w2_ref, b2_ref,
                w3_ref, b3_ref,
                w4_ref, b4_ref,
                o_ref):
    bf16 = jnp.bfloat16
    ew = b1_ref.dtype                      # elementwise dtype (bf16 on v6e/v7x, f32 on v5e)
    zero = jnp.zeros((), dtype=ew)

    # fc1 + ReLU  (bf16 MXU operands, f32 accumulate, `ew` elementwise)
    h = jnp.dot(x_ref[...].astype(bf16), w1_ref[...],
                preferred_element_type=jnp.float32)
    h = jnp.maximum(h.astype(ew) + b1_ref[...], zero)
    # fc2 + ReLU
    h = jnp.dot(h.astype(bf16), w2_ref[...],
                preferred_element_type=jnp.float32)
    h = jnp.maximum(h.astype(ew) + b2_ref[...], zero)
    # fc3 + ReLU (hidden width stays 64; purely in-kernel temporary)
    h = jnp.dot(h.astype(bf16), w3_ref[...],
                preferred_element_type=jnp.float32)
    h = jnp.maximum(h.astype(ew) + b3_ref[...], zero)
    # out (no activation; output N padded to 128 lanes for a dense vst)
    o = jnp.dot(h.astype(bf16), w4_ref[...],
                preferred_element_type=jnp.float32)
    o_ref[...] = (o + b4_ref[...].astype(jnp.float32)).astype(o_ref.dtype)


def prepare_dqn_params(params, elementwise_dtype=None):
    """One-time prep: pad only the output width to 128 lanes, cast weights to
    bf16 (MXU operands), biases to the elementwise dtype (bf16 on v6e/v7x,
    f32 on v5e).  Last-layer bias stays f32 (final add done in f32)."""
    if elementwise_dtype is None:
        elementwise_dtype = _default_elementwise_dtype()
    ew = elementwise_dtype
    w4, b4 = params["w4"], params["b4"]
    a = w4.shape[1]
    a_pad = _round_up(a, LANE)
    w4p = jnp.pad(w4, ((0, 0), (0, a_pad - a)))
    b4p = jnp.pad(b4, ((0, 0), (0, a_pad - a)))
    return {
        "w1": params["w1"].astype(jnp.bfloat16), "b1": params["b1"].astype(ew),
        "w2": params["w2"].astype(jnp.bfloat16), "b2": params["b2"].astype(ew),
        "w3": params["w3"].astype(jnp.bfloat16), "b3": params["b3"].astype(ew),
        "w4": w4p.astype(jnp.bfloat16),          "b4": b4p.astype(jnp.float32),
    }


@functools.partial(jax.jit, static_argnames=("action_size", "block_b"))
def dqn_forward(x, kparams, *, action_size, block_b=512):
    """x: [B, state_size] f32.  kparams: output of prepare_dqn_params."""
    B, S = x.shape
    a_pad = kparams["w4"].shape[1]

    # --- adaptive batch tiling ------------------------------------------------
    # block_b must be a sublane multiple (correctness: (8,128) BlockSpec rule).
    block_b = max(SUBLANE, _round_up(block_b, SUBLANE))
    n_tiles = _cdiv(B, block_b)
    # v7x has 2 TensorCores: make sure the "parallel" batch axis has >=2 steps
    # whenever there is enough work; harmless on single-TC v5e/v6e.
    if B >= 2 * SUBLANE:
        n_tiles = max(n_tiles, 2)
    bt = _round_up(_cdiv(B, n_tiles), SUBLANE)   # <= block_b by construction
    B_pad = _round_up(B, bt)
    if B_pad != B:
        x = jnp.pad(x, ((0, B_pad - B), (0, 0)))

    const = lambda shape: pl.BlockSpec(shape, lambda i: (0,) * len(shape))
    in_specs = [
        pl.BlockSpec((bt, S), lambda i: (i, 0)),          # x: pipelined over batch
        const(kparams["w1"].shape), const(kparams["b1"].shape),
        const(kparams["w2"].shape), const(kparams["b2"].shape),
        const(kparams["w3"].shape), const(kparams["b3"].shape),
        const(kparams["w4"].shape), const(kparams["b4"].shape),
    ]

    out = pl.pallas_call(
        _dqn_kernel,
        out_shape=jax.ShapeDtypeStruct((B_pad, a_pad), jnp.float32),
        grid_spec=pltpu.PrefetchScalarGridSpec(
            num_scalar_prefetch=0,
            grid=(B_pad // bt,),
            in_specs=in_specs,
            out_specs=pl.BlockSpec((bt, a_pad), lambda i: (i, 0)),
        ),
        compiler_params=pltpu.CompilerParams(
            dimension_semantics=("parallel",),   # megacore split of the batch axis
            vmem_limit_bytes=32 << 20,           # plenty for bt up to 1024 on all gens
        ),
    )(
        x,
        kparams["w1"], kparams["b1"],
        kparams["w2"], kparams["b2"],
        kparams["w3"], kparams["b3"],
        kparams["w4"], kparams["b4"],
    )
    return out[:B, :action_size]


def init_dqn_params(key, state_size, action_size):
    """Matches PyTorch nn.Linear default init: U(-1/sqrt(fan_in), 1/sqrt(fan_in)).
    Weights stored as [in, out] (transpose of PyTorch's [out, in])."""
    dims = [(state_size, 512), (512, 256), (256, 64), (64, action_size)]
    params = {}
    keys = jax.random.split(key, 2 * len(dims))
    for i, (fan_in, fan_out) in enumerate(dims):
        bound = 1.0 / jnp.sqrt(jnp.float32(fan_in))
        params[f"w{i + 1}"] = jax.random.uniform(
            keys[2 * i], (fan_in, fan_out), minval=-bound, maxval=bound,
            dtype=jnp.float32)
        params[f"b{i + 1}"] = jax.random.uniform(
            keys[2 * i + 1], (1, fan_out), minval=-bound, maxval=bound,
            dtype=jnp.float32)
    return params


def dqn_reference_f32(x, params):
    h = jnp.maximum(x @ params["w1"] + params["b1"], 0.0)
    h = jnp.maximum(h @ params["w2"] + params["b2"], 0.0)
    h = jnp.maximum(h @ params["w3"] + params["b3"], 0.0)
    return h @ params["w4"] + params["b4"]


def dqn_reference_like_kernel(x, params, elementwise_dtype):
    """Mirrors the kernel's numerics: bf16 MXU operands / f32 accumulate,
    `elementwise_dtype` bias-add + ReLU, f32 final bias add."""
    bf = jnp.bfloat16
    ew = elementwise_dtype
    zero = jnp.zeros((), dtype=ew)

    def mm(a, w):
        return jnp.dot(a.astype(bf), w.astype(bf),
                       preferred_element_type=jnp.float32)

    h = jnp.maximum(mm(x, params["w1"]).astype(ew) + params["b1"].astype(ew), zero)
    h = jnp.maximum(mm(h, params["w2"]).astype(ew) + params["b2"].astype(ew), zero)
    h = jnp.maximum(mm(h, params["w3"]).astype(ew) + params["b3"].astype(ew), zero)
    return mm(h, params["w4"]) + params["b4"].astype(jnp.float32)


if __name__ == "__main__":
    key = jax.random.PRNGKey(0)
    k_param, k_x1, k_x2 = jax.random.split(key, 3)

    state_size = 32
    action_size = 8

    params = init_dqn_params(k_param, state_size, action_size)
    ew_dtype = _default_elementwise_dtype()
    kparams = prepare_dqn_params(params, elementwise_dtype=ew_dtype)

    # Small inference-style batch (single grid step, padded to sublane).
    x_small = jax.random.normal(k_x1, (8, state_size), dtype=jnp.float32)
    out_small = jax.block_until_ready(
        dqn_forward(x_small, kparams, action_size=action_size))
    assert out_small.shape == (8, action_size), out_small.shape
    assert jnp.allclose(out_small,
                        dqn_reference_like_kernel(x_small, params, ew_dtype),
                        atol=2e-3, rtol=2e-3), "mismatch vs kernel-numerics reference (small)"
    assert jnp.allclose(out_small, dqn_reference_f32(x_small, params),
                        atol=1e-1, rtol=1e-1), "mismatch vs f32 reference (small)"

    # Larger training-style batch (exercises adaptive tiling + 2-step grid).
    x_big = jax.random.normal(k_x2, (300, state_size), dtype=jnp.float32)
    out_big = jax.block_until_ready(
        dqn_forward(x_big, kparams, action_size=action_size))
    assert out_big.shape == (300, action_size), out_big.shape
    assert jnp.allclose(out_big,
                        dqn_reference_like_kernel(x_big, params, ew_dtype),
                        atol=2e-3, rtol=2e-3), "mismatch vs kernel-numerics reference (big)"
    assert jnp.allclose(out_big, dqn_reference_f32(x_big, params),
                        atol=1e-1, rtol=1e-1), "mismatch vs f32 reference (big)"

    print("KERNEL_OK")
</pallas_src>

<mosaic_0001>
module attributes {stable_mosaic.version = 11 : i64} {
  func.func @_dqn_kernel(%arg0: i32, %arg1: memref<8x32xf32, #tpu.memory_space<vmem>>, %arg2: memref<32x512xbf16, #tpu.memory_space<vmem>>, %arg3: memref<1x512xbf16, #tpu.memory_space<vmem>>, %arg4: memref<512x256xbf16, #tpu.memory_space<vmem>>, %arg5: memref<1x256xbf16, #tpu.memory_space<vmem>>, %arg6: memref<256x64xbf16, #tpu.memory_space<vmem>>, %arg7: memref<1x64xbf16, #tpu.memory_space<vmem>>, %arg8: memref<64x128xbf16, #tpu.memory_space<vmem>>, %arg9: memref<1x128xf32, #tpu.memory_space<vmem>>, %arg10: memref<8x128xf32, #tpu.memory_space<vmem>>) attributes {dimension_semantics = [#tpu.dimension_semantics<parallel>], iteration_bounds = array<i64: 1>, scalar_prefetch = 0 : i64, scratch_operands = 0 : i64, tpu.core_type = #tpu.core_type<tc>, window_params = [{transform_indices = @transform_0, window_bounds = array<i64: 8, 32>}, {pipeline_mode = #tpu.pipeline_mode<synchronous>, transform_indices = @transform_1, window_bounds = array<i64: 32, 512>}, {pipeline_mode = #tpu.pipeline_mode<synchronous>, transform_indices = @transform_2, window_bounds = array<i64: 1, 512>}, {pipeline_mode = #tpu.pipeline_mode<synchronous>, transform_indices = @transform_3, window_bounds = array<i64: 512, 256>}, {pipeline_mode = #tpu.pipeline_mode<synchronous>, transform_indices = @transform_4, window_bounds = array<i64: 1, 256>}, {pipeline_mode = #tpu.pipeline_mode<synchronous>, transform_indices = @transform_5, window_bounds = array<i64: 256, 64>}, {pipeline_mode = #tpu.pipeline_mode<synchronous>, transform_indices = @transform_6, window_bounds = array<i64: 1, 64>}, {pipeline_mode = #tpu.pipeline_mode<synchronous>, transform_indices = @transform_7, window_bounds = array<i64: 64, 128>}, {pipeline_mode = #tpu.pipeline_mode<synchronous>, transform_indices = @transform_8, window_bounds = array<i64: 1, 128>}, {transform_indices = @transform_9, window_bounds = array<i64: 8, 128>}]} {
    %c0 = arith.constant 0 : index
    %c0_0 = arith.constant 0 : index
    %0 = vector.load %arg1[%c0, %c0_0] : memref<8x32xf32, #tpu.memory_space<vmem>>, vector<8x32xf32>
    %1 = arith.truncf %0 : vector<8x32xf32> to vector<8x32xbf16>
    %c0_1 = arith.constant 0 : index
    %c0_2 = arith.constant 0 : index
    %2 = vector.load %arg2[%c0_1, %c0_2] : memref<32x512xbf16, #tpu.memory_space<vmem>>, vector<32x512xbf16>
    %cst = arith.constant dense<0.000000e+00> : vector<8x512xf32>
    %3 = tpu.matmul %1, %2, %cst {dimension_numbers = #tpu.dot_dimension_numbers<[1], [0], [0], [1], [0, 0, 1, 1], [], []>} : vector<8x32xbf16>, vector<32x512xbf16>, vector<8x512xf32> -> vector<8x512xf32>
    %4 = arith.truncf %3 : vector<8x512xf32> to vector<8x512xbf16>
    %c0_3 = arith.constant 0 : index
    %c0_4 = arith.constant 0 : index
    %5 = vector.load %arg3[%c0_3, %c0_4] : memref<1x512xbf16, #tpu.memory_space<vmem>>, vector<1x512xbf16>
    %6 = vector.broadcast %5 : vector<1x512xbf16> to vector<8x512xbf16>
    %7 = arith.addf %4, %6 : vector<8x512xbf16>
    %cst_5 = arith.constant 0.000000e+00 : bf16
    %8 = vector.broadcast %cst_5 : bf16 to vector<8x512xbf16>
    %9 = arith.maximumf %7, %8 : vector<8x512xbf16>
    %c0_6 = arith.constant 0 : index
    %c0_7 = arith.constant 0 : index
    %10 = vector.load %arg4[%c0_6, %c0_7] : memref<512x256xbf16, #tpu.memory_space<vmem>>, vector<512x256xbf16>
    %cst_8 = arith.constant dense<0.000000e+00> : vector<8x256xf32>
    %11 = tpu.matmul %9, %10, %cst_8 {dimension_numbers = #tpu.dot_dimension_numbers<[1], [0], [0], [1], [0, 0, 1, 1], [], []>} : vector<8x512xbf16>, vector<512x256xbf16>, vector<8x256xf32> -> vector<8x256xf32>
    %12 = arith.truncf %11 : vector<8x256xf32> to vector<8x256xbf16>
    %c0_9 = arith.constant 0 : index
    %c0_10 = arith.constant 0 : index
    %13 = vector.load %arg5[%c0_9, %c0_10] : memref<1x256xbf16, #tpu.memory_space<vmem>>, vector<1x256xbf16>
    %14 = vector.broadcast %13 : vector<1x256xbf16> to vector<8x256xbf16>
    %15 = arith.addf %12, %14 : vector<8x256xbf16>
    %cst_11 = arith.constant 0.000000e+00 : bf16
    %16 = vector.broadcast %cst_11 : bf16 to vector<8x256xbf16>
    %17 = arith.maximumf %15, %16 : vector<8x256xbf16>
    %c0_12 = arith.constant 0 : index
    %c0_13 = arith.constant 0 : index
    %18 = vector.load %arg6[%c0_12, %c0_13] : memref<256x64xbf16, #tpu.memory_space<vmem>>, vector<256x64xbf16>
    %cst_14 = arith.constant dense<0.000000e+00> : vector<8x64xf32>
    %19 = tpu.matmul %17, %18, %cst_14 {dimension_numbers = #tpu.dot_dimension_numbers<[1], [0], [0], [1], [0, 0, 1, 1], [], []>} : vector<8x256xbf16>, vector<256x64xbf16>, vector<8x64xf32> -> vector<8x64xf32>
    %20 = arith.truncf %19 : vector<8x64xf32> to vector<8x64xbf16>
    %c0_15 = arith.constant 0 : index
    %c0_16 = arith.constant 0 : index
    %21 = vector.load %arg7[%c0_15, %c0_16] : memref<1x64xbf16, #tpu.memory_space<vmem>>, vector<1x64xbf16>
    %22 = vector.broadcast %21 : vector<1x64xbf16> to vector<8x64xbf16>
    %23 = arith.addf %20, %22 : vector<8x64xbf16>
    %cst_17 = arith.constant 0.000000e+00 : bf16
    %24 = vector.broadcast %cst_17 : bf16 to vector<8x64xbf16>
    %25 = arith.maximumf %23, %24 : vector<8x64xbf16>
    %c0_18 = arith.constant 0 : index
    %c0_19 = arith.constant 0 : index
    %26 = vector.load %arg8[%c0_18, %c0_19] : memref<64x128xbf16, #tpu.memory_space<vmem>>, vector<64x128xbf16>
    %cst_20 = arith.constant dense<0.000000e+00> : vector<8x128xf32>
    %27 = tpu.matmul %25, %26, %cst_20 {dimension_numbers = #tpu.dot_dimension_numbers<[1], [0], [0], [1], [0, 0, 1, 1], [], []>} : vector<8x64xbf16>, vector<64x128xbf16>, vector<8x128xf32> -> vector<8x128xf32>
    %c0_21 = arith.constant 0 : index
    %c0_22 = arith.constant 0 : index
    %28 = vector.load %arg9[%c0_21, %c0_22] : memref<1x128xf32, #tpu.memory_space<vmem>>, vector<1x128xf32>
    %29 = vector.broadcast %28 : vector<1x128xf32> to vector<8x128xf32>
    %30 = arith.addf %27, %29 : vector<8x128xf32>
    %c0_23 = arith.constant 0 : index
    %c0_24 = arith.constant 0 : index
    %31 = vector.load %arg10[%c0_23, %c0_24] : memref<8x128xf32, #tpu.memory_space<vmem>>, vector<8x128xf32>
    tpu.vector_store %arg10[%c0_23, %c0_24], %30 {strides = array<i32>} : memref<8x128xf32, #tpu.memory_space<vmem>>, vector<8x128xf32>,
    return
  }
  func.func @transform_0(%arg0: i32) -> (i32, i32) {
    %c0_i32 = arith.constant 0 : i32
    %c0_i32_0 = arith.constant 0 : i32
    return %arg0, %c0_i32 : i32, i32
  }
  func.func @transform_1(%arg0: i32) -> (i32, i32) {
    %c0_i32 = arith.constant 0 : i32
    %c0_i32_0 = arith.constant 0 : i32
    %c0_i32_1 = arith.constant 0 : i32
    return %c0_i32, %c0_i32_0 : i32, i32
  }
  func.func @transform_2(%arg0: i32) -> (i32, i32) {
    %c0_i32 = arith.constant 0 : i32
    %c0_i32_0 = arith.constant 0 : i32
    %c0_i32_1 = arith.constant 0 : i32
    return %c0_i32, %c0_i32_0 : i32, i32
  }
  func.func @transform_3(%arg0: i32) -> (i32, i32) {
    %c0_i32 = arith.constant 0 : i32
    %c0_i32_0 = arith.constant 0 : i32
    %c0_i32_1 = arith.constant 0 : i32
    return %c0_i32, %c0_i32_0 : i32, i32
  }
  func.func @transform_4(%arg0: i32) -> (i32, i32) {
    %c0_i32 = arith.constant 0 : i32
    %c0_i32_0 = arith.constant 0 : i32
    %c0_i32_1 = arith.constant 0 : i32
    return %c0_i32, %c0_i32_0 : i32, i32
  }
  func.func @transform_5(%arg0: i32) -> (i32, i32) {
    %c0_i32 = arith.constant 0 : i32
    %c0_i32_0 = arith.constant 0 : i32
    %c0_i32_1 = arith.constant 0 : i32
    return %c0_i32, %c0_i32_0 : i32, i32
  }
  func.func @transform_6(%arg0: i32) -> (i32, i32) {
    %c0_i32 = arith.constant 0 : i32
    %c0_i32_0 = arith.constant 0 : i32
    %c0_i32_1 = arith.constant 0 : i32
    return %c0_i32, %c0_i32_0 : i32, i32
  }
  func.func @transform_7(%arg0: i32) -> (i32, i32) {
    %c0_i32 = arith.constant 0 : i32
    %c0_i32_0 = arith.constant 0 : i32
    %c0_i32_1 = arith.constant 0 : i32
    return %c0_i32, %c0_i32_0 : i32, i32
  }
  func.func @transform_8(%arg0: i32) -> (i32, i32) {
    %c0_i32 = arith.constant 0 : i32
    %c0_i32_0 = arith.constant 0 : i32
    %c0_i32_1 = arith.constant 0 : i32
    return %c0_i32, %c0_i32_0 : i32, i32
  }
  func.func @transform_9(%arg0: i32) -> (i32, i32) {
    %c0_i32 = arith.constant 0 : i32
    %c0_i32_0 = arith.constant 0 : i32
    return %arg0, %c0_i32 : i32, i32
  }
}

</mosaic_0001>

<llo_original>
// kernel: dqn_forward.1
$region0: #{dqn_forward.1}
  #allocation0 [shape = 'u32[]', space=smem, size = 0x4, offset = 0x4, fixed_abs, tag = 'smem constant byte address 0x4 - core index']
  #allocation1 [shape = 'u32[144,128]{1,0:T(1,128)}', space=vmem, size = 0x12000, scoped, tag = 'internal scratch']
  %s0 = inlined_call_operand.vmem [shape: f32[8,32], index: 0, kind: input, shape index: {}]
  %s1 = inlined_call_operand.vmem [shape: bf16[32,512], index: 1, kind: input, shape index: {}]
  %s2 = inlined_call_operand.vmem [shape: bf16[1,512], index: 2, kind: input, shape index: {}]
  %s3 = inlined_call_operand.hbm [shape: bf16[512,256], index: 3, kind: input, shape index: {}]
  %s4 = inlined_call_operand.vmem [shape: bf16[1,256], index: 4, kind: input, shape index: {}]
  %s5 = inlined_call_operand.vmem [shape: bf16[256,64], index: 5, kind: input, shape index: {}]
  %s6 = inlined_call_operand.vmem [shape: bf16[1,64], index: 6, kind: input, shape index: {}]
  %s7 = inlined_call_operand.vmem [shape: bf16[64,128], index: 7, kind: input, shape index: {}]
  %s8 = inlined_call_operand.vmem [shape: f32[1,128], index: 8, kind: input, shape index: {}]
  %s9 = inlined_call_operand.hbm [shape: f32[8,128], index: 9, kind: output, shape index: {}]
  %s10 = sld [smem:[#allocation0]]
  $region50: #{dqn_forward.1} parent=0
    _
  %s12 = ssub.s32 1, %s10
  %s13 = scalar_select 0, %s12, %s10
  $region1: #{dqn_forward.1} parent=0
    #allocation2 [shape = 'u8[262144]{0}', space=vmem, size = 0x40000, scoped, tag = 'input window, operand 3, single buffered']
    #allocation3 [shape = 's32[1]{0}', space=sflag, size = 0x4, scoped, tag = 'scoped memory for dqn_forward.1']
    #allocation4 [shape = 's32[1]{0}', space=sflag, size = 0x4, scoped, tag = 'scoped memory for dqn_forward.1']
    #allocation5 [shape = 'u8[4096]{0}', space=vmem, size = 0x1000, scoped, tag = 'output window, operand 0, single buffered']
    %14 = vsyncpa [#allocation3], 0
    %15 = vsyncpa [#allocation4], 0
    // Predicated region
    $region2: #{dqn_forward.1} parent=1 // pred_check
      _
    $region3: #{dqn_forward.1} parent=1 // pred_check_branch
      %17 = sbr.rel (0) target = $region5
    $region4: #{dqn_forward.1} parent=1 // pred_region
      _
    $region5: #{dqn_forward.1} parent=1 // pred_fallthru
      _
    // Predicated region
    $region6: #{dqn_forward.1} parent=1 // pred_check
      _
    $region7: #{dqn_forward.1} parent=1 // pred_check_branch
      %19 = sbr.rel (0) target = $region9
    $region8: #{dqn_forward.1} parent=1 // pred_region
      _
    $region9: #{dqn_forward.1} parent=1 // pred_fallthru
      _
    // Predicated region
    $region10: #{dqn_forward.1} parent=1 // pred_check
      _
    $region11: #{dqn_forward.1} parent=1 // pred_check_branch
      %21 = sbr.rel (0) target = $region13
    $region12: #{dqn_forward.1} parent=1 // pred_region
      _
    $region13: #{dqn_forward.1} parent=1 // pred_fallthru
      _
    // Predicated region
    $region14: #{dqn_forward.1} parent=1 // pred_check
      _
    $region15: #{dqn_forward.1} parent=1 // pred_check_branch
      %23 = sbr.rel (0) target = $region17
    $region16: #{dqn_forward.1} parent=1 // pred_region
      %s25 = ssub.s32 8192, 8192
      %26 = vsyncadd [#allocation3], %s25
      %s27 = sshll.u32 [#allocation2], 4
      %s28 = int_to_ptr.vmem [resolvable:$true] %s27
      %33 = dma.hbm_to_vmem [thread:$0]  %s3, 8192, %s28, [#allocation3], 128, 128, 8
    $region17: #{dqn_forward.1} parent=1 // pred_fallthru
      _
    // Predicated region
    $region18: #{dqn_forward.1} parent=1 // pred_check
      _
    $region19: #{dqn_forward.1} parent=1 // pred_check_branch
      %35 = sbr.rel (0) target = $region21
    $region20: #{dqn_forward.1} parent=1 // pred_region
      _
    $region21: #{dqn_forward.1} parent=1 // pred_fallthru
      _
    // Predicated region
    $region22: #{dqn_forward.1} parent=1 // pred_check
      _
    $region23: #{dqn_forward.1} parent=1 // pred_check_branch
      %37 = sbr.rel (0) target = $region25
    $region24: #{dqn_forward.1} parent=1 // pred_region
      _
    $region25: #{dqn_forward.1} parent=1 // pred_fallthru
      _
    // Predicated region
    $region26: #{dqn_forward.1} parent=1 // pred_check
      _
    $region27: #{dqn_forward.1} parent=1 // pred_check_branch
      %39 = sbr.rel (0) target = $region29
    $region28: #{dqn_forward.1} parent=1 // pred_region
      _
    $region29: #{dqn_forward.1} parent=1 // pred_fallthru
      _
    // Predicated region
    $region30: #{dqn_forward.1} parent=1 // pred_check
      _
    $region31: #{dqn_forward.1} parent=1 // pred_check_branch
      %41 = sbr.rel (0) target = $region33
    $region32: #{dqn_forward.1} parent=1 // pred_region
      _
    $region33: #{dqn_forward.1} parent=1 // pred_fallthru
      _
    // Predicated region
    $region34: #{dqn_forward.1} parent=1 // pred_check
      _
    $region35: #{dqn_forward.1} parent=1 // pred_check_branch
      %43 = sbr.rel (0) target = $region37
    $region36: #{dqn_forward.1} parent=1 // pred_region
      _
    $region37: #{dqn_forward.1} parent=1 // pred_fallthru
      _
    // Predicated region
    $region38: #{dqn_forward.1} parent=1 // pred_check
      _
    $region39: #{dqn_forward.1} parent=1 // pred_check_branch
      %45 = sbr.rel (0) target = $region41
    $region40: #{dqn_forward.1} parent=1 // pred_region
      %46 = dma.done [#allocation3], 8192
    $region41: #{dqn_forward.1} parent=1 // pred_fallthru
      _
    %v48 = vld [vmem:[%s0] sm:$0xff]
    %v49 = vpack.c.bf16 %v48, %v48
    %v50 = vld [vmem:[%s1] sm:$0xff]
    %v51 = vld [vmem:[%s1 + $0x8] sm:$0xff]
    %v52 = vld [vmem:[%s1 + $0x10] sm:$0xff]
    %v53 = vld [vmem:[%s1 + $0x18] sm:$0xff]
    %v54 = vld [vmem:[%s1 + $0x20] sm:$0xff]
    %v55 = vld [vmem:[%s1 + $0x28] sm:$0xff]
    %v56 = vld [vmem:[%s1 + $0x30] sm:$0xff]
    %v57 = vld [vmem:[%s1 + $0x38] sm:$0xff]
    %v66 = vunpack.c.l.b16 %v50
    %v67 = vunpack.c.h.b16 %v50
    %v68 = vunpack.c.l.b16 %v51
    %v69 = vunpack.c.h.b16 %v51
    %v70 = vunpack.c.l.b16 %v52
    %v71 = vunpack.c.h.b16 %v52
    %v72 = vunpack.c.l.b16 %v53
    %v73 = vunpack.c.h.b16 %v53
    %v74 = vunpack.c.l.b16 %v54
    %v75 = vunpack.c.h.b16 %v54
    %v76 = vunpack.c.l.b16 %v55
    %v77 = vunpack.c.h.b16 %v55
    %v78 = vunpack.c.l.b16 %v56
    %v79 = vunpack.c.h.b16 %v56
    %v80 = vunpack.c.l.b16 %v57
    %v81 = vunpack.c.h.b16 %v57
    %v82 = vpack.c.b16 %v70, %v66
    %v83 = vpack.c.b16 %v71, %v67
    %v84 = vpack.c.b16 %v72, %v68
    %v85 = vpack.c.b16 %v73, %v69
    %v86 = vpack.c.b16 %v78, %v74
    %v87 = vpack.c.b16 %v79, %v75
    %v88 = vpack.c.b16 %v80, %v76
    %v89 = vpack.c.b16 %v81, %v77
    %vm98 = vcmask 261120
    %v100 = vsel %vm98, %v49, 0
    %102 = vmatprep.subr.bf16.mxu0 0
    %103 = vmatpush1.bf16.msra.mxu0 0
    %104 = vmatprep.subr.bf16.mxu0 0
    %105 = vmatpush1.bf16.msra.mxu0 0
    %106 = vmatprep.subr.bf16.mxu0 0
    %107 = vmatpush1.bf16.msra.mxu0 0
    %108 = vmatprep.subr.bf16.mxu0 0
    %109 = vmatpush1.bf16.msra.mxu0 0
    %110 = vmatprep.subr.bf16.mxu0 0
    %111 = vmatpush1.bf16.msra.mxu0 0
    %112 = vmatprep.subr.bf16.mxu0 0
    %113 = vmatpush1.bf16.msra.mxu0 0
    %114 = vmatprep.subr.bf16.mxu0 %v87
    %115 = vmatpush1.bf16.msra.mxu0 %v86
    %116 = vmatprep.subr.bf16.mxu0 %v83
    %117 = vmatpush1.bf16.msra.mxu0 %v82
    %118 = vmatprep.subr.bf16.mxu0 0
    %119 = vmatpush2.bf16.msra.mxu0 0
    %120 = vmatprep.subr.bf16.mxu0 0
    %121 = vmatpush2.bf16.msra.mxu0 0
    %122 = vmatprep.subr.bf16.mxu0 0
    %123 = vmatpush2.bf16.msra.mxu0 0
    %124 = vmatprep.subr.bf16.mxu0 0
    %125 = vmatpush2.bf16.msra.mxu0 0
    %126 = vmatprep.subr.bf16.mxu0 0
    %127 = vmatpush2.bf16.msra.mxu0 0
    %128 = vmatprep.subr.bf16.mxu0 0
    %129 = vmatpush2.bf16.msra.mxu0 0
    %130 = vmatprep.subr.bf16.mxu0 0
    %131 = vmatpush2.bf16.msra.mxu0 0
    %132 = vmatprep.subr.bf16.mxu0 0
    %133 = vmatpush2.bf16.msra.mxu0 0
    %134 = vmatprep.mubr.bf16.mxu0 0
    %135 = vmatmul.mubr.bf16.gmra.mxu0 %v100
    %v136 = vpop.f32.mrf.mxu0
    %v137 = vadd.f32 0.0, %v136
    %v138 = vpop.f32.mrf.mxu0
    %v139 = vadd.f32 0.0, %v138
    %v140 = vpop.f32.mrf.mxu0
    %v141 = vpop.f32.mrf.mxu0
    %142 = vdwg.mxu0
    %143 = vmatprep.subr.bf16.mxu0 0
    %144 = vmatpush1.bf16.msra.mxu0 0
    %145 = vmatprep.subr.bf16.mxu0 0
    %146 = vmatpush1.bf16.msra.mxu0 0
    %147 = vmatprep.subr.bf16.mxu0 0
    %148 = vmatpush1.bf16.msra.mxu0 0
    %149 = vmatprep.subr.bf16.mxu0 0
    %150 = vmatpush1.bf16.msra.mxu0 0
    %151 = vmatprep.subr.bf16.mxu0 0
    %152 = vmatpush1.bf16.msra.mxu0 0
    %153 = vmatprep.subr.bf16.mxu0 0
    %154 = vmatpush1.bf16.msra.mxu0 0
    %155 = vmatprep.subr.bf16.mxu0 %v89
    %156 = vmatpush1.bf16.msra.mxu0 %v88
    %157 = vmatprep.subr.bf16.mxu0 %v85
    %158 = vmatpush1.bf16.msra.mxu0 %v84
    %159 = vmatprep.subr.bf16.mxu0 0
    %160 = vmatpush2.bf16.msra.mxu0 0
    %161 = vmatprep.subr.bf16.mxu0 0
    %162 = vmatpush2.bf16.msra.mxu0 0
    %163 = vmatprep.subr.bf16.mxu0 0
    %164 = vmatpush2.bf16.msra.mxu0 0
    %165 = vmatprep.subr.bf16.mxu0 0
    %166 = vmatpush2.bf16.msra.mxu0 0
    %167 = vmatprep.subr.bf16.mxu0 0
    %168 = vmatpush2.bf16.msra.mxu0 0
    %169 = vmatprep.subr.bf16.mxu0 0
    %170 = vmatpush2.bf16.msra.mxu0 0
    %171 = vmatprep.subr.bf16.mxu0 0
    %172 = vmatpush2.bf16.msra.mxu0 0
    %173 = vmatprep.subr.bf16.mxu0 0
    %174 = vmatpush2.bf16.msra.mxu0 0
    %175 = vmatprep.mubr.bf16.mxu0 0
    %176 = vmatmul.mubr.bf16.gmra.mxu0 %v100
    %v177 = vpop.f32.mrf.mxu0
    %v178 = vadd.f32 0.0, %v177
    %v179 = vpop.f32.mrf.mxu0
    %v180 = vadd.f32 0.0, %v179
    %v181 = vpop.f32.mrf.mxu0
    %v182 = vpop.f32.mrf.mxu0
    %183 = vdwg.mxu0
    %v184 = vpack.c.bf16 %v137, %v137
    %v185 = vpack.c.bf16 %v139, %v139
    %v186 = vpack.c.bf16 %v178, %v178
    %v187 = vpack.c.bf16 %v180, %v180
    %v188 = vld [vmem:[%s2] sm:$0xf]
    %v191 = vunpack.c.l.s4 1966171168
    %v192 = vunpack.c.0.s8 %v191
    %v193 = vlaneseq
    %v194 = vshrl.u32 %v193, 7
    %v195 = vsub.s32 %v192, %v194
    %v196 = vrot.slane %v188, %v195
    %v197 = vcombine.high %v196, %v196
    %v199 = vunpack.c.l.s4 1966171168
    %v200 = vunpack.c.0.s8 %v199
    %v201 = vlaneseq
    %v202 = vshrl.u32 %v201, 7
    %v203 = vsub.s32 %v200, %v202
    %v204 = vrot.slane %v196, %v203
    %v206 = vunpack.c.l.s4 1966171168
    %v207 = vunpack.c.0.s8 %v206
    %v208 = vlaneseq
    %v209 = vshrl.u32 %v208, 7
    %v210 = vsub.s32 %v207, %v209
    %v211 = vrot.slane %v197, %v210
    %v212 = vcombine.high %v204, %v204
    %v213 = vcombine.high %v211, %v211
    %v215 = vpack.i.b16 %v204, %v204
    %v217 = vlaneseq
    %v218 = vshrl.u32 %v217, 7
    %v219 = vsub.s32 0, %v218
    %v220 = vrot.slane %v215, %v219
    %v222 = vpack.i.b16 %v211, %v211
    %v224 = vlaneseq
    %v225 = vshrl.u32 %v224, 7
    %v226 = vsub.s32 0, %v225
    %v227 = vrot.slane %v222, %v226
    %v229 = vpack.i.b16 %v212, %v212
    %v231 = vlaneseq
    %v232 = vshrl.u32 %v231, 7
    %v233 = vsub.s32 0, %v232
    %v234 = vrot.slane %v229, %v233
    %v236 = vpack.i.b16 %v213, %v213
    %v238 = vlaneseq
    %v239 = vshrl.u32 %v238, 7
    %v240 = vsub.s32 0, %v239
    %v241 = vrot.slane %v236, %v240
    %v242 = vadd.bf16 %v184, %v220
    %v243 = vadd.bf16 %v185, %v227
    %v244 = vadd.bf16 %v186, %v234
    %v245 = vadd.bf16 %v187, %v241
    %v246 = vmax.bf16 %v242, 0
    %v247 = vmax.bf16 %v243, 0
    %v248 = vmax.bf16 %v244, 0
    %v249 = vmax.bf16 %v245, 0
    %v250 = vld [vmem:[#allocation2] sm:$0xff]
    %v251 = vld [vmem:[#allocation2 + $0x8] sm:$0xff]
    %v252 = vld [vmem:[#allocation2 + $0x10] sm:$0xff]
    %v253 = vld [vmem:[#allocation2 + $0x18] sm:$0xff]
    %v254 = vld [vmem:[#allocation2 + $0x20] sm:$0xff]
    %v255 = vld [vmem:[#allocation2 + $0x28] sm:$0xff]
    %v256 = vld [vmem:[#allocation2 + $0x30] sm:$0xff]
    %v257 = vld [vmem:[#allocation2 + $0x38] sm:$0xff]
    %v258 = vld [vmem:[#allocation2 + $0x40] sm:$0xff]
    %v259 = vld [vmem:[#allocation2 + $0x48] sm:$0xff]
    %v260 = vld [vmem:[#allocation2 + $0x50] sm:$0xff]
    %v261 = vld [vmem:[#allocation2 + $0x58] sm:$0xff]
    %v262 = vld [vmem:[#allocation2 + $0x60] sm:$0xff]
    %v263 = vld [vmem:[#allocation2 + $0x68] sm:$0xff]
    %v264 = vld [vmem:[#allocation2 + $0x70] sm:$0xff]
    %v265 = vld [vmem:[#allocation2 + $0x78] sm:$0xff]
    %v266 = vld [vmem:[#allocation2 + $0x80] sm:$0xff]
    %v267 = vld [vmem:[#allocation2 + $0x88] sm:$0xff]
    %v268 = vld [vmem:[#allocation2 + $0x90] sm:$0xff]
    %v269 = vld [vmem:[#allocation2 + $0x98] sm:$0xff]
    %v270 = vld [vmem:[#allocation2 + $0xa0] sm:$0xff]
    %v271 = vld [vmem:[#allocation2 + $0xa8] sm:$0xff]
    %v272 = vld [vmem:[#allocation2 + $0xb0] sm:$0xff]
    %v273 = vld [vmem:[#allocation2 + $0xb8] sm:$0xff]
    %v274 = vld [vmem:[#allocation2 + $0xc0] sm:$0xff]
    %v275 = vld [vmem:[#allocation2 + $0xc8] sm:$0xff]
    %v276 = vld [vmem:[#allocation2 + $0xd0] sm:$0xff]
    %v277 = vld [vmem:[#allocation2 + $0xd8] sm:$0xff]
    %v278 = vld [vmem:[#allocation2 + $0xe0] sm:$0xff]
    %v279 = vld [vmem:[#allocation2 + $0xe8] sm:$0xff]
    %v280 = vld [vmem:[#allocation2 + $0xf0] sm:$0xff]
    %v281 = vld [vmem:[#allocation2 + $0xf8] sm:$0xff]
    %v282 = vld [vmem:[#allocation2 + $0x100] sm:$0xff]
    %v283 = vld [vmem:[#allocation2 + $0x108] sm:$0xff]
    %v284 = vld [vmem:[#allocation2 + $0x110] sm:$0xff]
    %v285 = vld [vmem:[#allocation2 + $0x118] sm:$0xff]
    %v286 = vld [vmem:[#allocation2 + $0x120] sm:$0xff]
    %v287 = vld [vmem:[#allocation2 + $0x128] sm:$0xff]
    %v288 = vld [vmem:[#allocation2 + $0x130] sm:$0xff]
    %v289 = vld [vmem:[#allocation2 + $0x138] sm:$0xff]
    %v290 = vld [vmem:[#allocation2 + $0x140] sm:$0xff]
    %v291 = vld [vmem:[#allocation2 + $0x148] sm:$0xff]
    %v292 = vld [vmem:[#allocation2 + $0x150] sm:$0xff]
    %v293 = vld [vmem:[#allocation2 + $0x158] sm:$0xff]
    %v294 = vld [vmem:[#allocation2 + $0x160] sm:$0xff]
    %v295 = vld [vmem:[#allocation2 + $0x168] sm:$0xff]
    %v296 = vld [vmem:[#allocation2 + $0x170] sm:$0xff]
    %v297 = vld [vmem:[#allocation2 + $0x178] sm:$0xff]
    %v298 = vld [vmem:[#allocation2 + $0x180] sm:$0xff]
    %v299 = vld [vmem:[#allocation2 + $0x188] sm:$0xff]
    %v300 = vld [vmem:[#allocation2 + $0x190] sm:$0xff]
    %v301 = vld [vmem:[#allocation2 + $0x198] sm:$0xff]
    %v302 = vld [vmem:[#allocation2 + $0x1a0] sm:$0xff]
    %v303 = vld [vmem:[#allocation2 + $0x1a8] sm:$0xff]
    %v304 = vld [vmem:[#allocation2 + $0x1b0] sm:$0xff]
    %v305 = vld [vmem:[#allocation2 + $0x1b8] sm:$0xff]
    %v306 = vld [vmem:[#allocation2 + $0x1c0] sm:$0xff]
    %v307 = vld [vmem:[#allocation2 + $0x1c8] sm:$0xff]
    %v308 = vld [vmem:[#allocation2 + $0x1d0] sm:$0xff]
    %v309 = vld [vmem:[#allocation2 + $0x1d8] sm:$0xff]
    %v310 = vld [vmem:[#allocation2 + $0x1e0] sm:$0xff]
    %v311 = vld [vmem:[#allocation2 + $0x1e8] sm:$0xff]
    %v312 = vld [vmem:[#allocation2 + $0x1f0] sm:$0xff]
    %v313 = vld [vmem:[#allocation2 + $0x1f8] sm:$0xff]
    %v378 = vunpack.c.l.b16 %v250
    %v379 = vunpack.c.h.b16 %v250
    %v380 = vunpack.c.l.b16 %v251
    %v381 = vunpack.c.h.b16 %v251
    %v382 = vunpack.c.l.b16 %v252
    %v383 = vunpack.c.h.b16 %v252
    %v384 = vunpack.c.l.b16 %v253
    %v385 = vunpack.c.h.b16 %v253
    %v386 = vunpack.c.l.b16 %v254
    %v387 = vunpack.c.h.b16 %v254
    %v388 = vunpack.c.l.b16 %v255
    %v389 = vunpack.c.h.b16 %v255
    %v390 = vunpack.c.l.b16 %v256
    %v391 = vunpack.c.h.b16 %v256
    %v392 = vunpack.c.l.b16 %v257
    %v393 = vunpack.c.h.b16 %v257
    %v394 = vunpack.c.l.b16 %v258
    %v395 = vunpack.c.h.b16 %v258
    %v396 = vunpack.c.l.b16 %v259
    %v397 = vunpack.c.h.b16 %v259
    %v398 = vunpack.c.l.b16 %v260
    %v399 = vunpack.c.h.b16 %v260
    %v400 = vunpack.c.l.b16 %v261
    %v401 = vunpack.c.h.b16 %v261
    %v402 = vunpack.c.l.b16 %v262
    %v403 = vunpack.c.h.b16 %v262
    %v404 = vunpack.c.l.b16 %v263
    %v405 = vunpack.c.h.b16 %v263
    %v406 = vunpack.c.l.b16 %v264
    %v407 = vunpack.c.h.b16 %v264
    %v408 = vunpack.c.l.b16 %v265
    %v409 = vunpack.c.h.b16 %v265
    %v410 = vunpack.c.l.b16 %v266
    %v411 = vunpack.c.h.b16 %v266
    %v412 = vunpack.c.l.b16 %v267
    %v413 = vunpack.c.h.b16 %v267
    %v414 = vunpack.c.l.b16 %v268
    %v415 = vunpack.c.h.b16 %v268
    %v416 = vunpack.c.l.b16 %v269
    %v417 = vunpack.c.h.b16 %v269
    %v418 = vunpack.c.l.b16 %v270
    %v419 = vunpack.c.h.b16 %v270
    %v420 = vunpack.c.l.b16 %v271
    %v421 = vunpack.c.h.b16 %v271
    %v422 = vunpack.c.l.b16 %v272
    %v423 = vunpack.c.h.b16 %v272
    %v424 = vunpack.c.l.b16 %v273
    %v425 = vunpack.c.h.b16 %v273
    %v426 = vunpack.c.l.b16 %v274
    %v427 = vunpack.c.h.b16 %v274
    %v428 = vunpack.c.l.b16 %v275
    %v429 = vunpack.c.h.b16 %v275
    %v430 = vunpack.c.l.b16 %v276
    %v431 = vunpack.c.h.b16 %v276
    %v432 = vunpack.c.l.b16 %v277
    %v433 = vunpack.c.h.b16 %v277
    %v434 = vunpack.c.l.b16 %v278
    %v435 = vunpack.c.h.b16 %v278
    %v436 = vunpack.c.l.b16 %v279
    %v437 = vunpack.c.h.b16 %v279
    %v438 = vunpack.c.l.b16 %v280
    %v439 = vunpack.c.h.b16 %v280
    %v440 = vunpack.c.l.b16 %v281
    %v441 = vunpack.c.h.b16 %v281
    %v442 = vunpack.c.l.b16 %v282
    %v443 = vunpack.c.h.b16 %v282
    %v444 = vunpack.c.l.b16 %v283
    %v445 = vunpack.c.h.b16 %v283
    %v446 = vunpack.c.l.b16 %v284
    %v447 = vunpack.c.h.b16 %v284
    %v448 = vunpack.c.l.b16 %v285
    %v449 = vunpack.c.h.b16 %v285
    %v450 = vunpack.c.l.b16 %v286
    %v451 = vunpack.c.h.b16 %v286
    %v452 = vunpack.c.l.b16 %v287
    %v453 = vunpack.c.h.b16 %v287
    %v454 = vunpack.c.l.b16 %v288
    %v455 = vunpack.c.h.b16 %v288
    %v456 = vunpack.c.l.b16 %v289
    %v457 = vunpack.c.h.b16 %v289
    %v458 = vunpack.c.l.b16 %v290
    %v459 = vunpack.c.h.b16 %v290
    %v460 = vunpack.c.l.b16 %v291
    %v461 = vunpack.c.h.b16 %v291
    %v462 = vunpack.c.l.b16 %v292
    %v463 = vunpack.c.h.b16 %v292
    %v464 = vunpack.c.l.b16 %v293
    %v465 = vunpack.c.h.b16 %v293
    %v466 = vunpack.c.l.b16 %v294
    %v467 = vunpack.c.h.b16 %v294
    %v468 = vunpack.c.l.b16 %v295
    %v469 = vunpack.c.h.b16 %v295
    %v470 = vunpack.c.l.b16 %v296
    %v471 = vunpack.c.h.b16 %v296
    %v472 = vunpack.c.l.b16 %v297
    %v473 = vunpack.c.h.b16 %v297
    %v474 = vunpack.c.l.b16 %v298
    %v475 = vunpack.c.h.b16 %v298
    %v476 = vunpack.c.l.b16 %v299
    %v477 = vunpack.c.h.b16 %v299
    %v478 = vunpack.c.l.b16 %v300
    %v479 = vunpack.c.h.b16 %v300
    %v480 = vunpack.c.l.b16 %v301
    %v481 = vunpack.c.h.b16 %v301
    %v482 = vunpack.c.l.b16 %v302
    %v483 = vunpack.c.h.b16 %v302
    %v484 = vunpack.c.l.b16 %v303
    %v485 = vunpack.c.h.b16 %v303
    %v486 = vunpack.c.l.b16 %v304
    %v487 = vunpack.c.h.b16 %v304
    %v488 = vunpack.c.l.b16 %v305
    %v489 = vunpack.c.h.b16 %v305
    %v490 = vunpack.c.l.b16 %v306
    %v491 = vunpack.c.h.b16 %v306
    %v492 = vunpack.c.l.b16 %v307
    %v493 = vunpack.c.h.b16 %v307
    %v494 = vunpack.c.l.b16 %v308
    %v495 = vunpack.c.h.b16 %v308
    %v496 = vunpack.c.l.b16 %v309
    %v497 = vunpack.c.h.b16 %v309
    %v498 = vunpack.c.l.b16 %v310
    %v499 = vunpack.c.h.b16 %v310
    %v500 = vunpack.c.l.b16 %v311
    %v501 = vunpack.c.h.b16 %v311
    %v502 = vunpack.c.l.b16 %v312
    %v503 = vunpack.c.h.b16 %v312
    %v504 = vunpack.c.l.b16 %v313
    %v505 = vunpack.c.h.b16 %v313
    %v506 = vpack.c.b16 %v380, %v378
    %v507 = vpack.c.b16 %v381, %v379
    %v508 = vpack.c.b16 %v384, %v382
    %v509 = vpack.c.b16 %v385, %v383
    %v510 = vpack.c.b16 %v388, %v386
    %v511 = vpack.c.b16 %v389, %v387
    %v512 = vpack.c.b16 %v392, %v390
    %v513 = vpack.c.b16 %v393, %v391
    %v514 = vpack.c.b16 %v396, %v394
    %v515 = vpack.c.b16 %v397, %v395
    %v516 = vpack.c.b16 %v400, %v398
    %v517 = vpack.c.b16 %v401, %v399
    %v518 = vpack.c.b16 %v404, %v402
    %v519 = vpack.c.b16 %v405, %v403
    %v520 = vpack.c.b16 %v408, %v406
    %v521 = vpack.c.b16 %v409, %v407
    %v522 = vpack.c.b16 %v412, %v410
    %v523 = vpack.c.b16 %v413, %v411
    %v524 = vpack.c.b16 %v416, %v414
    %v525 = vpack.c.b16 %v417, %v415
    %v526 = vpack.c.b16 %v420, %v418
    %v527 = vpack.c.b16 %v421, %v419
    %v528 = vpack.c.b16 %v424, %v422
    %v529 = vpack.c.b16 %v425, %v423
    %v530 = vpack.c.b16 %v428, %v426
    %v531 = vpack.c.b16 %v429, %v427
    %v532 = vpack.c.b16 %v432, %v430
    %v533 = vpack.c.b16 %v433, %v431
    %v534 = vpack.c.b16 %v436, %v434
    %v535 = vpack.c.b16 %v437, %v435
    %v536 = vpack.c.b16 %v440, %v438
    %v537 = vpack.c.b16 %v441, %v439
    %v538 = vpack.c.b16 %v444, %v442
    %v539 = vpack.c.b16 %v445, %v443
    %v540 = vpack.c.b16 %v448, %v446
    %v541 = vpack.c.b16 %v449, %v447
    %v542 = vpack.c.b16 %v452, %v450
    %v543 = vpack.c.b16 %v453, %v451
    %v544 = vpack.c.b16 %v456, %v454
    %v545 = vpack.c.b16 %v457, %v455
    %v546 = vpack.c.b16 %v460, %v458
    %v547 = vpack.c.b16 %v461, %v459
    %v548 = vpack.c.b16 %v464, %v462
    %v549 = vpack.c.b16 %v465, %v463
    %v550 = vpack.c.b16 %v468, %v466
    %v551 = vpack.c.b16 %v469, %v467
    %v552 = vpack.c.b16 %v472, %v470
    %v553 = vpack.c.b16 %v473, %v471
    %v554 = vpack.c.b16 %v476, %v474
    %v555 = vpack.c.b16 %v477, %v475
    %v556 = vpack.c.b16 %v480, %v478
    %v557 = vpack.c.b16 %v481, %v479
    %v558 = vpack.c.b16 %v484, %v482
    %v559 = vpack.c.b16 %v485, %v483
    %v560 = vpack.c.b16 %v488, %v486
    %v561 = vpack.c.b16 %v489, %v487
    %v562 = vpack.c.b16 %v492, %v490
    %v563 = vpack.c.b16 %v493, %v491
    %v564 = vpack.c.b16 %v496, %v494
    %v565 = vpack.c.b16 %v497, %v495
    %v566 = vpack.c.b16 %v500, %v498
    %v567 = vpack.c.b16 %v501, %v499
    %v568 = vpack.c.b16 %v504, %v502
    %v569 = vpack.c.b16 %v505, %v503
    %634 = vmatprep.subr.bf16.mxu0 %v521
    %635 = vmatpush1.bf16.msra.mxu0 %v520
    %636 = vmatprep.subr.bf16.mxu0 %v519
    %637 = vmatpush1.bf16.msra.mxu0 %v518
    %638 = vmatprep.subr.bf16.mxu0 %v517
    %639 = vmatpush1.bf16.msra.mxu0 %v516
    %640 = vmatprep.subr.bf16.mxu0 %v515
    %641 = vmatpush1.bf16.msra.mxu0 %v514
    %642 = vmatprep.subr.bf16.mxu0 %v513
    %643 = vmatpush1.bf16.msra.mxu0 %v512
    %644 = vmatprep.subr.bf16.mxu0 %v511
    %645 = vmatpush1.bf16.msra.mxu0 %v510
    %646 = vmatprep.subr.bf16.mxu0 %v509
    %647 = vmatpush1.bf16.msra.mxu0 %v508
    %648 = vmatprep.subr.bf16.mxu0 %v507
    %649 = vmatpush1.bf16.msra.mxu0 %v506
    %650 = vmatprep.subr.bf16.mxu0 %v537
    %651 = vmatpush2.bf16.msra.mxu0 %v536
    %652 = vmatprep.subr.bf16.mxu0 %v535
    %653 = vmatpush2.bf16.msra.mxu0 %v534
    %654 = vmatprep.subr.bf16.mxu0 %v533
    %655 = vmatpush2.bf16.msra.mxu0 %v532
    %656 = vmatprep.subr.bf16.mxu0 %v531
    %657 = vmatpush2.bf16.msra.mxu0 %v530
    %658 = vmatprep.subr.bf16.mxu0 %v529
    %659 = vmatpush2.bf16.msra.mxu0 %v528
    %660 = vmatprep.subr.bf16.mxu0 %v527
    %661 = vmatpush2.bf16.msra.mxu0 %v526
    %662 = vmatprep.subr.bf16.mxu0 %v525
    %663 = vmatpush2.bf16.msra.mxu0 %v524
    %664 = vmatprep.subr.bf16.mxu0 %v523
    %665 = vmatpush2.bf16.msra.mxu0 %v522
    %666 = vmatprep.mubr.bf16.mxu0 %v247
    %667 = vmatmul.mubr.bf16.gmra.mxu0 %v246
    %v668 = vpop.f32.mrf.mxu0
    %v669 = vadd.f32 0.0, %v668
    %v670 = vpop.f32.mrf.mxu0
    %v671 = vadd.f32 0.0, %v670
    %v672 = vpop.f32.mrf.mxu0
    %v673 = vpop.f32.mrf.mxu0
    %674 = vdwg.mxu0
    %675 = vmatprep.subr.bf16.mxu0 %v553
    %676 = vmatpush1.bf16.msra.mxu0 %v552
    %677 = vmatprep.subr.bf16.mxu0 %v551
    %678 = vmatpush1.bf16.msra.mxu0 %v550
    %679 = vmatprep.subr.bf16.mxu0 %v549
    %680 = vmatpush1.bf16.msra.mxu0 %v548
    %681 = vmatprep.subr.bf16.mxu0 %v547
    %682 = vmatpush1.bf16.msra.mxu0 %v546
    %683 = vmatprep.subr.bf16.mxu0 %v545
    %684 = vmatpush1.bf16.msra.mxu0 %v544
    %685 = vmatprep.subr.bf16.mxu0 %v543
    %686 = vmatpush1.bf16.msra.mxu0 %v542
    %687 = vmatprep.subr.bf16.mxu0 %v541
    %688 = vmatpush1.bf16.msra.mxu0 %v540
    %689 = vmatprep.subr.bf16.mxu0 %v539
    %690 = vmatpush1.bf16.msra.mxu0 %v538
    %691 = vmatprep.subr.bf16.mxu0 %v569
    %692 = vmatpush2.bf16.msra.mxu0 %v568
    %693 = vmatprep.subr.bf16.mxu0 %v567
    %694 = vmatpush2.bf16.msra.mxu0 %v566
    %695 = vmatprep.subr.bf16.mxu0 %v565
    %696 = vmatpush2.bf16.msra.mxu0 %v564
    %697 = vmatprep.subr.bf16.mxu0 %v563
    %698 = vmatpush2.bf16.msra.mxu0 %v562
    %699 = vmatprep.subr.bf16.mxu0 %v561
    %700 = vmatpush2.bf16.msra.mxu0 %v560
    %701 = vmatprep.subr.bf16.mxu0 %v559
    %702 = vmatpush2.bf16.msra.mxu0 %v558
    %703 = vmatprep.subr.bf16.mxu0 %v557
    %704 = vmatpush2.bf16.msra.mxu0 %v556
    %705 = vmatprep.subr.bf16.mxu0 %v555
    %706 = vmatpush2.bf16.msra.mxu0 %v554
    %707 = vmatprep.mubr.bf16.mxu0 %v249
    %708 = vmatmul.mubr.bf16.gmra.mxu0 %v248
    %v709 = vpop.f32.mrf.mxu0
    %v710 = vadd.f32 %v669, %v709
    %v711 = vpop.f32.mrf.mxu0
    %v712 = vadd.f32 %v671, %v711
    %v713 = vpop.f32.mrf.mxu0
    %v714 = vpop.f32.mrf.mxu0
    %715 = vdwg.mxu0
    %v716 = vpack.c.bf16 %v710, %v710
    %v717 = vpack.c.bf16 %v712, %v712
    %v718 = vld [vmem:[%s4] sm:$0x3]
    %v721 = vunpack.c.l.s4 1966171168
    %v722 = vunpack.c.0.s8 %v721
    %v723 = vlaneseq
    %v724 = vshrl.u32 %v723, 7
    %v725 = vsub.s32 %v722, %v724
    %v726 = vrot.slane %v718, %v725
    %v727 = vcombine.high %v726, %v726
    %v729 = vunpack.c.l.s4 1966171168
    %v730 = vunpack.c.0.s8 %v729
    %v731 = vlaneseq
    %v732 = vshrl.u32 %v731, 7
    %v733 = vsub.s32 %v730, %v732
    %v734 = vrot.slane %v726, %v733
    %v736 = vunpack.c.l.s4 1966171168
    %v737 = vunpack.c.0.s8 %v736
    %v738 = vlaneseq
    %v739 = vshrl.u32 %v738, 7
    %v740 = vsub.s32 %v737, %v739
    %v741 = vrot.slane %v727, %v740
    %v743 = vpack.i.b16 %v734, %v734
    %v745 = vlaneseq
    %v746 = vshrl.u32 %v745, 7
    %v747 = vsub.s32 0, %v746
    %v748 = vrot.slane %v743, %v747
    %v750 = vpack.i.b16 %v741, %v741
    %v752 = vlaneseq
    %v753 = vshrl.u32 %v752, 7
    %v754 = vsub.s32 0, %v753
    %v755 = vrot.slane %v750, %v754
    %v756 = vadd.bf16 %v716, %v748
    %v757 = vadd.bf16 %v717, %v755
    %v758 = vmax.bf16 %v756, 0
    %v759 = vmax.bf16 %v757, 0
    %v760 = vld [vmem:[%s5] sm:$0xf]
    %v761 = vld [vmem:[%s5 + $0x4] sm:$0xf]
    %v762 = vld [vmem:[%s5 + $0x8] sm:$0xf]
    %v763 = vld [vmem:[%s5 + $0xc] sm:$0xf]
    %v764 = vld [vmem:[%s5 + $0x10] sm:$0xf]
    %v765 = vld [vmem:[%s5 + $0x14] sm:$0xf]
    %v766 = vld [vmem:[%s5 + $0x18] sm:$0xf]
    %v767 = vld [vmem:[%s5 + $0x1c] sm:$0xf]
    %v768 = vld [vmem:[%s5 + $0x20] sm:$0xf]
    %v769 = vld [vmem:[%s5 + $0x24] sm:$0xf]
    %v770 = vld [vmem:[%s5 + $0x28] sm:$0xf]
    %v771 = vld [vmem:[%s5 + $0x2c] sm:$0xf]
    %v772 = vld [vmem:[%s5 + $0x30] sm:$0xf]
    %v773 = vld [vmem:[%s5 + $0x34] sm:$0xf]
    %v774 = vld [vmem:[%s5 + $0x38] sm:$0xf]
    %v775 = vld [vmem:[%s5 + $0x3c] sm:$0xf]
    %v776 = vld [vmem:[%s5 + $0x40] sm:$0xf]
    %v777 = vld [vmem:[%s5 + $0x44] sm:$0xf]
    %v778 = vld [vmem:[%s5 + $0x48] sm:$0xf]
    %v779 = vld [vmem:[%s5 + $0x4c] sm:$0xf]
    %v780 = vld [vmem:[%s5 + $0x50] sm:$0xf]
    %v781 = vld [vmem:[%s5 + $0x54] sm:$0xf]
    %v782 = vld [vmem:[%s5 + $0x58] sm:$0xf]
    %v783 = vld [vmem:[%s5 + $0x5c] sm:$0xf]
    %v784 = vld [vmem:[%s5 + $0x60] sm:$0xf]
    %v785 = vld [vmem:[%s5 + $0x64] sm:$0xf]
    %v786 = vld [vmem:[%s5 + $0x68] sm:$0xf]
    %v787 = vld [vmem:[%s5 + $0x6c] sm:$0xf]
    %v788 = vld [vmem:[%s5 + $0x70] sm:$0xf]
    %v789 = vld [vmem:[%s5 + $0x74] sm:$0xf]
    %v790 = vld [vmem:[%s5 + $0x78] sm:$0xf]
    %v791 = vld [vmem:[%s5 + $0x7c] sm:$0xf]
    %v824 = vunpack.c.l.b16 %v760
    %v825 = vunpack.c.l.b16 %v761
    %v826 = vunpack.c.l.b16 %v762
    %v827 = vunpack.c.l.b16 %v763
    %v828 = vunpack.c.l.b16 %v764
    %v829 = vunpack.c.l.b16 %v765
    %v830 = vunpack.c.l.b16 %v766
    %v831 = vunpack.c.l.b16 %v767
    %v832 = vunpack.c.l.b16 %v768
    %v833 = vunpack.c.l.b16 %v769
    %v834 = vunpack.c.l.b16 %v770
    %v835 = vunpack.c.l.b16 %v771
    %v836 = vunpack.c.l.b16 %v772
    %v837 = vunpack.c.l.b16 %v773
    %v838 = vunpack.c.l.b16 %v774
    %v839 = vunpack.c.l.b16 %v775
    %v840 = vunpack.c.l.b16 %v776
    %v841 = vunpack.c.l.b16 %v777
    %v842 = vunpack.c.l.b16 %v778
    %v843 = vunpack.c.l.b16 %v779
    %v844 = vunpack.c.l.b16 %v780
    %v845 = vunpack.c.l.b16 %v781
    %v846 = vunpack.c.l.b16 %v782
    %v847 = vunpack.c.l.b16 %v783
    %v848 = vunpack.c.l.b16 %v784
    %v849 = vunpack.c.l.b16 %v785
    %v850 = vunpack.c.l.b16 %v786
    %v851 = vunpack.c.l.b16 %v787
    %v852 = vunpack.c.l.b16 %v788
    %v853 = vunpack.c.l.b16 %v789
    %v854 = vunpack.c.l.b16 %v790
    %v855 = vunpack.c.l.b16 %v791
    %v856 = vpack.c.b16 %v825, %v824
    %v857 = vpack.c.b16 %v827, %v826
    %v858 = vpack.c.b16 %v829, %v828
    %v859 = vpack.c.b16 %v831, %v830
    %v860 = vpack.c.b16 %v833, %v832
    %v861 = vpack.c.b16 %v835, %v834
    %v862 = vpack.c.b16 %v837, %v836
    %v863 = vpack.c.b16 %v839, %v838
    %v864 = vpack.c.b16 %v841, %v840
    %v865 = vpack.c.b16 %v843, %v842
    %v866 = vpack.c.b16 %v845, %v844
    %v867 = vpack.c.b16 %v847, %v846
    %v868 = vpack.c.b16 %v849, %v848
    %v869 = vpack.c.b16 %v851, %v850
    %v870 = vpack.c.b16 %v853, %v852
    %v871 = vpack.c.b16 %v855, %v854
    %888 = vmatprep.subr.bf16.mxu0 0
    %889 = vmatpush1.bf16.msra.mxu0 %v863
    %890 = vmatprep.subr.bf16.mxu0 0
    %891 = vmatpush1.bf16.msra.mxu0 %v862
    %892 = vmatprep.subr.bf16.mxu0 0
    %893 = vmatpush1.bf16.msra.mxu0 %v861
    %894 = vmatprep.subr.bf16.mxu0 0
    %895 = vmatpush1.bf16.msra.mxu0 %v860
    %896 = vmatprep.subr.bf16.mxu0 0
    %897 = vmatpush1.bf16.msra.mxu0 %v859
    %898 = vmatprep.subr.bf16.mxu0 0
    %899 = vmatpush1.bf16.msra.mxu0 %v858
    %900 = vmatprep.subr.bf16.mxu0 0
    %901 = vmatpush1.bf16.msra.mxu0 %v857
    %902 = vmatprep.subr.bf16.mxu0 0
    %903 = vmatpush1.bf16.msra.mxu0 %v856
    %904 = vmatprep.subr.bf16.mxu0 0
    %905 = vmatpush2.bf16.msra.mxu0 %v871
    %906 = vmatprep.subr.bf16.mxu0 0
    %907 = vmatpush2.bf16.msra.mxu0 %v870
    %908 = vmatprep.subr.bf16.mxu0 0
    %909 = vmatpush2.bf16.msra.mxu0 %v869
    %910 = vmatprep.subr.bf16.mxu0 0
    %911 = vmatpush2.bf16.msra.mxu0 %v868
    %912 = vmatprep.subr.bf16.mxu0 0
    %913 = vmatpush2.bf16.msra.mxu0 %v867
    %914 = vmatprep.subr.bf16.mxu0 0
    %915 = vmatpush2.bf16.msra.mxu0 %v866
    %916 = vmatprep.subr.bf16.mxu0 0
    %917 = vmatpush2.bf16.msra.mxu0 %v865
    %918 = vmatprep.subr.bf16.mxu0 0
    %919 = vmatpush2.bf16.msra.mxu0 %v864
    %920 = vmatprep.mubr.bf16.mxu0 %v759
    %921 = vmatmul.mubr.bf16.gmra.mxu0 %v758
    %v922 = vpop.f32.mrf.mxu0
    %v923 = vadd.f32 0.0, %v922
    %v924 = vpop.f32.mrf.mxu0
    %v925 = vpop.f32.mrf.mxu0
    %v926 = vpop.f32.mrf.mxu0
    %927 = vdwg.mxu0
    %v928 = vpack.c.bf16 %v923, %v923
    %v929 = vld [vmem:[%s6] sm:$0x1]
    %v931 = vpack.i.b16 %v929, %v929
    %v933 = vlaneseq
    %v934 = vshrl.u32 %v933, 7
    %v935 = vsub.s32 0, %v934
    %v936 = vrot.slane %v931, %v935
    %v937 = vadd.bf16 %v928, %v936
    %v938 = vmax.bf16 %v937, 0
    %v939 = vld [vmem:[%s7] sm:$0xf]
    %v940 = vld [vmem:[%s7 + $0x4] sm:$0xf]
    %v941 = vld [vmem:[%s7 + $0x8] sm:$0xf]
    %v942 = vld [vmem:[%s7 + $0xc] sm:$0xf]
    %v943 = vld [vmem:[%s7 + $0x10] sm:$0xf]
    %v944 = vld [vmem:[%s7 + $0x14] sm:$0xf]
    %v945 = vld [vmem:[%s7 + $0x18] sm:$0xf]
    %v946 = vld [vmem:[%s7 + $0x1c] sm:$0xf]
    %v947 = vld [vmem:[%s8] sm:$0x1]
    %v949 = vlaneseq
    %v950 = vshrl.u32 %v949, 7
    %v951 = vsub.s32 0, %v950
    %v952 = vrot.slane %v947, %v951
    %v962 = vunpack.c.l.b16 %v939
    %v963 = vunpack.c.l.b16 %v940
    %v964 = vunpack.c.l.b16 %v941
    %v965 = vunpack.c.l.b16 %v942
    %v966 = vunpack.c.l.b16 %v943
    %v967 = vunpack.c.l.b16 %v944
    %v968 = vunpack.c.l.b16 %v945
    %v969 = vunpack.c.l.b16 %v946
    %v970 = vpack.c.b16 %v963, %v962
    %v971 = vpack.c.b16 %v965, %v964
    %v972 = vpack.c.b16 %v967, %v966
    %v973 = vpack.c.b16 %v969, %v968
    %vm978 = vcmask 523264
    %v980 = vsel %vm978, %v938, 0
    %982 = vmatprep.subr.bf16.mxu0 0
    %983 = vmatpush1.bf16.msra.mxu0 0
    %984 = vmatprep.subr.bf16.mxu0 0
    %985 = vmatpush1.bf16.msra.mxu0 0
    %986 = vmatprep.subr.bf16.mxu0 0
    %987 = vmatpush1.bf16.msra.mxu0 0
    %988 = vmatprep.subr.bf16.mxu0 0
    %989 = vmatpush1.bf16.msra.mxu0 0
    %990 = vmatprep.subr.bf16.mxu0 0
    %991 = vmatpush1.bf16.msra.mxu0 %v973
    %992 = vmatprep.subr.bf16.mxu0 0
    %993 = vmatpush1.bf16.msra.mxu0 %v972
    %994 = vmatprep.subr.bf16.mxu0 0
    %995 = vmatpush1.bf16.msra.mxu0 %v971
    %996 = vmatprep.subr.bf16.mxu0 0
    %997 = vmatpush1.bf16.msra.mxu0 %v970
    %998 = vmatprep.subr.bf16.mxu0 0
    %999 = vmatpush2.bf16.msra.mxu0 0
    %1000 = vmatprep.subr.bf16.mxu0 0
    %1001 = vmatpush2.bf16.msra.mxu0 0
    %1002 = vmatprep.subr.bf16.mxu0 0
    %1003 = vmatpush2.bf16.msra.mxu0 0
    %1004 = vmatprep.subr.bf16.mxu0 0
    %1005 = vmatpush2.bf16.msra.mxu0 0
    %1006 = vmatprep.subr.bf16.mxu0 0
    %1007 = vmatpush2.bf16.msra.mxu0 0
    %1008 = vmatprep.subr.bf16.mxu0 0
    %1009 = vmatpush2.bf16.msra.mxu0 0
    %1010 = vmatprep.subr.bf16.mxu0 0
    %1011 = vmatpush2.bf16.msra.mxu0 0
    %1012 = vmatprep.subr.bf16.mxu0 0
    %1013 = vmatpush2.bf16.msra.mxu0 0
    %1014 = vmatprep.mubr.bf16.mxu0 0
    %1015 = vmatmul.mubr.bf16.gmra.mxu0 %v980
    %v1016 = vpop.f32.mrf.mxu0
    %v1017 = vadd.f32 %v952, %v1016
    %v1018 = vpop.f32.mrf.mxu0
    %v1019 = vpop.f32.mrf.mxu0
    %v1020 = vpop.f32.mrf.mxu0
    %1021 = vdwg.mxu0
    %1022 = vst [vmem:[#allocation5] sm:$0xff] %v1017
    // Predicated region
    $region42: #{dqn_forward.1} parent=1 // pred_check
      _
    $region43: #{dqn_forward.1} parent=1 // pred_check_branch
      %1024 = sbr.rel (0) target = $region45
    $region44: #{dqn_forward.1} parent=1 // pred_region
      %s1026 = ssub.s32 128, 128
      %1027 = vsyncadd [#allocation4], %s1026
      %s1029 = sshll.u32 [#allocation5], 4
      %s1030 = int_to_ptr.vmem [resolvable:$true] %s1029
      %1032 = dma.vmem_to_hbm [thread:$0]  %s1030, 128, %s9, [#allocation4]
    $region45: #{dqn_forward.1} parent=1 // pred_fallthru
      _
    // Predicated region
    $region46: #{dqn_forward.1} parent=1 // pred_check
      _
    $region47: #{dqn_forward.1} parent=1 // pred_check_branch
      %1034 = sbr.rel (0) target = $region49
    $region48: #{dqn_forward.1} parent=1 // pred_region
      %1035 = dma.done [#allocation4], 128
    $region49: #{dqn_forward.1} parent=1 // pred_fallthru
      _
    %1036 = vsyncpa [#allocation3], 1
    %1037 = vsyncpa [#allocation4], 1

</llo_original>
